<compile_context>
chip_gen: v7x
topology: tpu7x:2x2x1
jax: 0.10.0
libtpu: 0.0.40
codegen_flags: <defaults>
</compile_context>

<pallas_src>
import jax
import jax.numpy as jnp
from jax.experimental import pallas as pl
from jax.experimental.pallas import tpu as pltpu

LANE = 128


def _round_up(n, m):
    return ((n + m - 1) // m) * m


def dqn_kernel(x_ref, w1_ref, b1_ref, w2_ref, b2_ref, w3_ref, b3_ref, out_ref):
    # Feature-major: activations are (features, batch_tile); batch on lanes.
    # Three bf16 MXU matmuls with f32 accumulation, fused f32 bias-add + ReLU
    # on the VPU. Weight/bias blocks are VMEM-resident across all grid steps.
    x = x_ref[...]                                                   # (in, tb) bf16
    h1 = jnp.dot(w1_ref[...], x, preferred_element_type=jnp.float32) + b1_ref[...]
    h1 = jnp.maximum(h1, 0.0).astype(jnp.bfloat16)                   # (hidden, tb)
    h2 = jnp.dot(w2_ref[...], h1, preferred_element_type=jnp.float32) + b2_ref[...]
    h2 = jnp.maximum(h2, 0.0).astype(jnp.bfloat16)                   # (hidden, tb)
    q = jnp.dot(w3_ref[...], h2, preferred_element_type=jnp.float32) + b3_ref[...]
    out_ref[...] = q.astype(out_ref.dtype)                           # (out, tb) lane-dense


def dqn_forward(x, params, *, batch_tile=2048):
    """Fused DQN forward. x: (B, input_size) f32 -> (B, output_size) f32.

    NOTE: tiny inference batches (B ~ 8) are pure dispatch overhead here; in
    production route those through plain jnp or keep this call inside a larger
    jitted training step. Don't tune tiles for that case.
    """
    w1, b1, w2, b2, w3, b3 = (params[k] for k in ("w1", "b1", "w2", "b2", "w3", "b3"))
    B, in_size = x.shape
    hidden = w1.shape[0]
    out_size = w3.shape[0]

    # Batch rides the lane dim -> tile must be a multiple of 128 (validated here
    # so caller-supplied values can't break the (8,128) tiling rule).
    batch_tile = _round_up(max(batch_tile, LANE), LANE)
    if B <= batch_tile:
        tb = _round_up(B, LANE)                 # single grid step
    elif B <= 2 * batch_tile:
        tb = _round_up(-(-B // 2), LANE)        # two balanced steps (v7x megacore)
    else:
        tb = batch_tile
    b_pad = _round_up(B, tb)
    grid = (b_pad // tb,)

    # One fused wrapper pass: transpose to feature-major and cast to bf16.
    x_t = x.T.astype(jnp.bfloat16)              # (in_size, B)
    if b_pad != B:
        x_t = jnp.pad(x_t, ((0, 0), (0, b_pad - B)))

    def resident(arr):
        # Same block index every grid step -> DMA'd once, stays VMEM-resident.
        return pl.BlockSpec(arr.shape, lambda i: (0, 0))

    flops = 2 * b_pad * (in_size * hidden + hidden * hidden + hidden * out_size)
    bytes_accessed = (
        x_t.size * x_t.dtype.itemsize
        + b_pad * out_size * 4
        + sum(a.size * a.dtype.itemsize for a in (w1, b1, w2, b2, w3, b3))
    )

    out_t = pl.pallas_call(
        dqn_kernel,
        out_shape=jax.ShapeDtypeStruct((out_size, b_pad), jnp.float32),
        grid=grid,
        in_specs=[
            pl.BlockSpec((in_size, tb), lambda i: (0, i)),
            resident(w1), resident(b1),
            resident(w2), resident(b2),
            resident(w3), resident(b3),
        ],
        out_specs=pl.BlockSpec((out_size, tb), lambda i: (0, i)),
        compiler_params=pltpu.CompilerParams(
            dimension_semantics=("parallel",),
        ),
        cost_estimate=pl.CostEstimate(
            flops=flops, transcendentals=0, bytes_accessed=bytes_accessed),
    )(x_t, w1, b1, w2, b2, w3, b3)

    # Padded batch columns only hold relu(bias) garbage; sliced off here.
    return out_t[:, :B].T


def init_params(key, input_size, hidden_size, output_size):
    """nn.Linear default init: U(-1/sqrt(fan_in), 1/sqrt(fan_in)).

    Weights are stored bf16 in the native PyTorch (out, in) layout (forward
    results differ from a float32 torch DQN by ~1e-2; fine for inference).
    Biases are (out, 1) f32 so they broadcast over the batch/lane dimension.
    """
    ks = jax.random.split(key, 6)

    def linear(kw, kb, fan_in, fan_out):
        bound = 1.0 / jnp.sqrt(jnp.float32(fan_in))
        w = jax.random.uniform(kw, (fan_out, fan_in), jnp.float32, -bound, bound)
        b = jax.random.uniform(kb, (fan_out, 1), jnp.float32, -bound, bound)
        return w.astype(jnp.bfloat16), b

    w1, b1 = linear(ks[0], ks[1], input_size, hidden_size)
    w2, b2 = linear(ks[2], ks[3], hidden_size, hidden_size)
    w3, b3 = linear(ks[4], ks[5], hidden_size, output_size)
    return dict(w1=w1, b1=b1, w2=w2, b2=b2, w3=w3, b3=b3)


def ref_forward(x, params):
    """Plain-JAX reference with the same bf16-input / f32-accumulate math."""
    def lin(h, w, b):  # w: (out, in) bf16, b: (out, 1) f32
        return jnp.dot(h.astype(jnp.bfloat16), w.T,
                       preferred_element_type=jnp.float32) + b.T

    h1 = jax.nn.relu(lin(x, params["w1"], params["b1"]))
    h2 = jax.nn.relu(lin(h1, params["w2"], params["b2"]))
    return lin(h2, params["w3"], params["b3"])


if __name__ == "__main__":
    # Snake DQN: 11 state features, 32 hidden units, 3 actions.
    input_size, hidden_size, output_size = 11, 32, 3

    key = jax.random.PRNGKey(0)
    k_p, k_small, k_mid, k_big = jax.random.split(key, 4)
    params = init_params(k_p, input_size, hidden_size, output_size)

    # Small inference-style batch (single grid step; dispatch-overhead bound).
    x_small = jax.random.normal(k_small, (8, input_size), jnp.float32)
    out_small = dqn_forward(x_small, params)
    jax.block_until_ready(out_small)
    assert out_small.shape == (8, output_size)
    assert jnp.allclose(out_small, ref_forward(x_small, params), atol=1e-2, rtol=1e-2)

    # Batch slightly above one tile: exercises the balanced 2-step (megacore) split.
    x_mid = jax.random.normal(k_mid, (1500, input_size), jnp.float32)
    out_mid = dqn_forward(x_mid, params, batch_tile=1024)     # tb=768, grid=(2,)
    jax.block_until_ready(out_mid)
    assert out_mid.shape == (1500, output_size)
    assert jnp.allclose(out_mid, ref_forward(x_mid, params), atol=1e-2, rtol=1e-2)

    # Replay-buffer-style batch: exercises padding + a multi-step batch grid.
    x_big = jax.random.normal(k_big, (2500, input_size), jnp.float32)
    out_big = dqn_forward(x_big, params, batch_tile=1024)     # tb=1024, grid=(3,)
    jax.block_until_ready(out_big)
    assert out_big.shape == (2500, output_size)
    assert jnp.allclose(out_big, ref_forward(x_big, params), atol=1e-2, rtol=1e-2)

    print("KERNEL_OK")
</pallas_src>

<mosaic_0001>
module attributes {stable_mosaic.version = 11 : i64} {
  func.func @dqn_kernel(%arg0: i32, %arg1: memref<11x128xbf16, #tpu.memory_space<vmem>>, %arg2: memref<32x11xbf16, #tpu.memory_space<vmem>>, %arg3: memref<32x1xf32, #tpu.memory_space<vmem>>, %arg4: memref<32x32xbf16, #tpu.memory_space<vmem>>, %arg5: memref<32x1xf32, #tpu.memory_space<vmem>>, %arg6: memref<3x32xbf16, #tpu.memory_space<vmem>>, %arg7: memref<3x1xf32, #tpu.memory_space<vmem>>, %arg8: memref<3x128xf32, #tpu.memory_space<vmem>>) attributes {dimension_semantics = [#tpu.dimension_semantics<parallel>], iteration_bounds = array<i64: 1>, scalar_prefetch = 0 : i64, scratch_operands = 0 : i64, tpu.core_type = #tpu.core_type<tc>, window_params = [{transform_indices = @transform_0, window_bounds = array<i64: 11, 128>}, {pipeline_mode = #tpu.pipeline_mode<synchronous>, transform_indices = @transform_1, window_bounds = array<i64: 32, 11>}, {pipeline_mode = #tpu.pipeline_mode<synchronous>, transform_indices = @transform_2, window_bounds = array<i64: 32, 1>}, {pipeline_mode = #tpu.pipeline_mode<synchronous>, transform_indices = @transform_3, window_bounds = array<i64: 32, 32>}, {pipeline_mode = #tpu.pipeline_mode<synchronous>, transform_indices = @transform_4, window_bounds = array<i64: 32, 1>}, {pipeline_mode = #tpu.pipeline_mode<synchronous>, transform_indices = @transform_5, window_bounds = array<i64: 3, 32>}, {pipeline_mode = #tpu.pipeline_mode<synchronous>, transform_indices = @transform_6, window_bounds = array<i64: 3, 1>}, {transform_indices = @transform_7, window_bounds = array<i64: 3, 128>}]} {
    %c0 = arith.constant 0 : index
    %c0_0 = arith.constant 0 : index
    %0 = vector.load %arg1[%c0, %c0_0] : memref<11x128xbf16, #tpu.memory_space<vmem>>, vector<11x128xbf16>
    %c0_1 = arith.constant 0 : index
    %c0_2 = arith.constant 0 : index
    %1 = vector.load %arg2[%c0_1, %c0_2] : memref<32x11xbf16, #tpu.memory_space<vmem>>, vector<32x11xbf16>
    %cst = arith.constant dense<0.000000e+00> : vector<32x128xf32>
    %2 = tpu.matmul %1, %0, %cst {dimension_numbers = #tpu.dot_dimension_numbers<[1], [0], [0], [1], [0, 0, 1, 1], [], []>} : vector<32x11xbf16>, vector<11x128xbf16>, vector<32x128xf32> -> vector<32x128xf32>
    %c0_3 = arith.constant 0 : index
    %c0_4 = arith.constant 0 : index
    %3 = vector.load %arg3[%c0_3, %c0_4] : memref<32x1xf32, #tpu.memory_space<vmem>>, vector<32x1xf32>
    %4 = vector.broadcast %3 : vector<32x1xf32> to vector<32x128xf32>
    %5 = arith.addf %2, %4 : vector<32x128xf32>
    %cst_5 = arith.constant 0.000000e+00 : f32
    %6 = vector.broadcast %cst_5 : f32 to vector<32x128xf32>
    %7 = arith.maximumf %5, %6 : vector<32x128xf32>
    %8 = arith.truncf %7 : vector<32x128xf32> to vector<32x128xbf16>
    %c0_6 = arith.constant 0 : index
    %c0_7 = arith.constant 0 : index
    %9 = vector.load %arg4[%c0_6, %c0_7] : memref<32x32xbf16, #tpu.memory_space<vmem>>, vector<32x32xbf16>
    %cst_8 = arith.constant dense<0.000000e+00> : vector<32x128xf32>
    %10 = tpu.matmul %9, %8, %cst_8 {dimension_numbers = #tpu.dot_dimension_numbers<[1], [0], [0], [1], [0, 0, 1, 1], [], []>} : vector<32x32xbf16>, vector<32x128xbf16>, vector<32x128xf32> -> vector<32x128xf32>
    %c0_9 = arith.constant 0 : index
    %c0_10 = arith.constant 0 : index
    %11 = vector.load %arg5[%c0_9, %c0_10] : memref<32x1xf32, #tpu.memory_space<vmem>>, vector<32x1xf32>
    %12 = vector.broadcast %11 : vector<32x1xf32> to vector<32x128xf32>
    %13 = arith.addf %10, %12 : vector<32x128xf32>
    %cst_11 = arith.constant 0.000000e+00 : f32
    %14 = vector.broadcast %cst_11 : f32 to vector<32x128xf32>
    %15 = arith.maximumf %13, %14 : vector<32x128xf32>
    %16 = arith.truncf %15 : vector<32x128xf32> to vector<32x128xbf16>
    %c0_12 = arith.constant 0 : index
    %c0_13 = arith.constant 0 : index
    %17 = vector.load %arg6[%c0_12, %c0_13] : memref<3x32xbf16, #tpu.memory_space<vmem>>, vector<3x32xbf16>
    %cst_14 = arith.constant dense<0.000000e+00> : vector<3x128xf32>
    %18 = tpu.matmul %17, %16, %cst_14 {dimension_numbers = #tpu.dot_dimension_numbers<[1], [0], [0], [1], [0, 0, 1, 1], [], []>} : vector<3x32xbf16>, vector<32x128xbf16>, vector<3x128xf32> -> vector<3x128xf32>
    %c0_15 = arith.constant 0 : index
    %c0_16 = arith.constant 0 : index
    %19 = vector.load %arg7[%c0_15, %c0_16] : memref<3x1xf32, #tpu.memory_space<vmem>>, vector<3x1xf32>
    %20 = vector.broadcast %19 : vector<3x1xf32> to vector<3x128xf32>
    %21 = arith.addf %18, %20 : vector<3x128xf32>
    %c0_17 = arith.constant 0 : index
    %c0_18 = arith.constant 0 : index
    %22 = vector.load %arg8[%c0_17, %c0_18] : memref<3x128xf32, #tpu.memory_space<vmem>>, vector<3x128xf32>
    tpu.vector_store %arg8[%c0_17, %c0_18], %21 {strides = array<i32>} : memref<3x128xf32, #tpu.memory_space<vmem>>, vector<3x128xf32>,
    return
  }
  func.func @transform_0(%arg0: i32) -> (i32, i32) {
    %c0_i32 = arith.constant 0 : i32
    %c0_i32_0 = arith.constant 0 : i32
    return %c0_i32, %arg0 : i32, i32
  }
  func.func @transform_1(%arg0: i32) -> (i32, i32) {
    %c0_i32 = arith.constant 0 : i32
    %c0_i32_0 = arith.constant 0 : i32
    %c0_i32_1 = arith.constant 0 : i32
    return %c0_i32, %c0_i32_0 : i32, i32
  }
  func.func @transform_2(%arg0: i32) -> (i32, i32) {
    %c0_i32 = arith.constant 0 : i32
    %c0_i32_0 = arith.constant 0 : i32
    %c0_i32_1 = arith.constant 0 : i32
    return %c0_i32, %c0_i32_0 : i32, i32
  }
  func.func @transform_3(%arg0: i32) -> (i32, i32) {
    %c0_i32 = arith.constant 0 : i32
    %c0_i32_0 = arith.constant 0 : i32
    %c0_i32_1 = arith.constant 0 : i32
    return %c0_i32, %c0_i32_0 : i32, i32
  }
  func.func @transform_4(%arg0: i32) -> (i32, i32) {
    %c0_i32 = arith.constant 0 : i32
    %c0_i32_0 = arith.constant 0 : i32
    %c0_i32_1 = arith.constant 0 : i32
    return %c0_i32, %c0_i32_0 : i32, i32
  }
  func.func @transform_5(%arg0: i32) -> (i32, i32) {
    %c0_i32 = arith.constant 0 : i32
    %c0_i32_0 = arith.constant 0 : i32
    %c0_i32_1 = arith.constant 0 : i32
    return %c0_i32, %c0_i32_0 : i32, i32
  }
  func.func @transform_6(%arg0: i32) -> (i32, i32) {
    %c0_i32 = arith.constant 0 : i32
    %c0_i32_0 = arith.constant 0 : i32
    %c0_i32_1 = arith.constant 0 : i32
    return %c0_i32, %c0_i32_0 : i32, i32
  }
  func.func @transform_7(%arg0: i32) -> (i32, i32) {
    %c0_i32 = arith.constant 0 : i32
    %c0_i32_0 = arith.constant 0 : i32
    return %c0_i32, %arg0 : i32, i32
  }
}

</mosaic_0001>

<llo_original>
// kernel: tpu_custom_call.1
$region0: #{tpu_custom_call.1}
  #allocation0 [shape = 'u32[]', space=smem, size = 0x4, offset = 0x4, fixed_abs, tag = 'smem constant byte address 0x4 - core index']
  #allocation1 [shape = 'u32[144,128]{1,0:T(1,128)}', space=vmem, size = 0x12000, scoped, tag = 'internal scratch']
  %s0 = inlined_call_operand.vmem [shape: bf16[11,128], index: 0, kind: input, shape index: {}]
  %s1 = inlined_call_operand.vmem [shape: bf16[32,11], index: 1, kind: input, shape index: {}]
  %s2 = inlined_call_operand.vmem [shape: f32[32,1], index: 2, kind: input, shape index: {}]
  %s3 = inlined_call_operand.vmem [shape: bf16[32,32], index: 3, kind: input, shape index: {}]
  %s4 = inlined_call_operand.vmem [shape: f32[32,1], index: 4, kind: input, shape index: {}]
  %s5 = inlined_call_operand.vmem [shape: bf16[3,32], index: 5, kind: input, shape index: {}]
  %s6 = inlined_call_operand.vmem [shape: f32[3,1], index: 6, kind: input, shape index: {}]
  %s7 = inlined_call_operand.hbm [shape: f32[3,128], index: 7, kind: output, shape index: {}]
  %s8 = sld [smem:[#allocation0]]
  $region38: #{tpu_custom_call.1} parent=0
    _
  %s10 = ssub.s32 1, %s8
  %s11 = scalar_select 0, %s10, %s8
  $region1: #{tpu_custom_call.1} parent=0
    #allocation2 [shape = 'u8[2048]{0}', space=vmem, size = 0x800, scoped, tag = 'output window, operand 0, single buffered']
    #allocation3 [shape = 's32[1]{0}', space=sflag, size = 0x4, scoped, tag = 'scoped memory for tpu_custom_call.1']
    %12 = vsyncpa [#allocation3], 0
    // Predicated region
    $region2: #{tpu_custom_call.1} parent=1 // pred_check
      _
    $region3: #{tpu_custom_call.1} parent=1 // pred_check_branch
      %14 = sbr.rel (0) target = $region5
    $region4: #{tpu_custom_call.1} parent=1 // pred_region
      _
    $region5: #{tpu_custom_call.1} parent=1 // pred_fallthru
      _
    // Predicated region
    $region6: #{tpu_custom_call.1} parent=1 // pred_check
      _
    $region7: #{tpu_custom_call.1} parent=1 // pred_check_branch
      %16 = sbr.rel (0) target = $region9
    $region8: #{tpu_custom_call.1} parent=1 // pred_region
      _
    $region9: #{tpu_custom_call.1} parent=1 // pred_fallthru
      _
    // Predicated region
    $region10: #{tpu_custom_call.1} parent=1 // pred_check
      _
    $region11: #{tpu_custom_call.1} parent=1 // pred_check_branch
      %18 = sbr.rel (0) target = $region13
    $region12: #{tpu_custom_call.1} parent=1 // pred_region
      _
    $region13: #{tpu_custom_call.1} parent=1 // pred_fallthru
      _
    // Predicated region
    $region14: #{tpu_custom_call.1} parent=1 // pred_check
      _
    $region15: #{tpu_custom_call.1} parent=1 // pred_check_branch
      %20 = sbr.rel (0) target = $region17
    $region16: #{tpu_custom_call.1} parent=1 // pred_region
      _
    $region17: #{tpu_custom_call.1} parent=1 // pred_fallthru
      _
    // Predicated region
    $region18: #{tpu_custom_call.1} parent=1 // pred_check
      _
    $region19: #{tpu_custom_call.1} parent=1 // pred_check_branch
      %22 = sbr.rel (0) target = $region21
    $region20: #{tpu_custom_call.1} parent=1 // pred_region
      _
    $region21: #{tpu_custom_call.1} parent=1 // pred_fallthru
      _
    // Predicated region
    $region22: #{tpu_custom_call.1} parent=1 // pred_check
      _
    $region23: #{tpu_custom_call.1} parent=1 // pred_check_branch
      %24 = sbr.rel (0) target = $region25
    $region24: #{tpu_custom_call.1} parent=1 // pred_region
      _
    $region25: #{tpu_custom_call.1} parent=1 // pred_fallthru
      _
    // Predicated region
    $region26: #{tpu_custom_call.1} parent=1 // pred_check
      _
    $region27: #{tpu_custom_call.1} parent=1 // pred_check_branch
      %26 = sbr.rel (0) target = $region29
    $region28: #{tpu_custom_call.1} parent=1 // pred_region
      _
    $region29: #{tpu_custom_call.1} parent=1 // pred_fallthru
      _
    %v28 = vld [vmem:[%s0] sm:$0xf]
    %v29 = vld [vmem:[%s0 + $0x4] sm:$0x3]
    %v30 = vld [vmem:[%s1] sm:$0xf]
    %v31 = vld [vmem:[%s1 + $0x4] sm:$0xf]
    %v32 = vld [vmem:[%s1 + $0x8] sm:$0xf]
    %v33 = vld [vmem:[%s1 + $0xc] sm:$0xf]
    %v34 = vld [vmem:[%s2] sm:$0xff]
    %v35 = vld [vmem:[%s2 + $0x8] sm:$0xff]
    %v36 = vld [vmem:[%s2 + $0x10] sm:$0xff]
    %v37 = vld [vmem:[%s2 + $0x18] sm:$0xff]
    %39 = vset.pattern.permute.xlu0 0
    %40 = vperm.xlu0 %39, %v34
    %v41 = vpop.permute.xlu0 %40
    %44 = vset.pattern.permute.xlu0 0
    %45 = vperm.xlu0 %44, %v35
    %v46 = vpop.permute.xlu0 %45
    %49 = vset.pattern.permute.xlu0 0
    %50 = vperm.xlu0 %49, %v36
    %v51 = vpop.permute.xlu0 %50
    %54 = vset.pattern.permute.xlu0 0
    %55 = vperm.xlu0 %54, %v37
    %v56 = vpop.permute.xlu0 %55
    %v62 = vunpack.c.l.b16 %v30
    %v63 = vunpack.c.l.b16 %v31
    %v64 = vunpack.c.l.b16 %v32
    %v65 = vunpack.c.l.b16 %v33
    %v66 = vpack.c.b16 %v63, %v62
    %v67 = vpack.c.b16 %v65, %v64
    %v70 = vunpack.c.l.b16 %v28
    %v71 = vunpack.c.l.b16 %v29
    %v72 = vpack.c.b16 %v71, %v70
    %vm73 = vcmask 89088
    %v75 = vsel %vm73, %v66, 0
    %v78 = vsel %vm73, %v67, 0
    %vm80 = vcmask 1044480
    %vm81 = vcmask 1045504
    %v82 = vsel %vm80, 4294967295, 65535
    %v83 = vsel %vm81, %v82, 0
    %v85 = vand.u32 %v72, %v83
    %87 = vmatprep.subr.bf16.mxu0 0
    %88 = vmatpush1.bf16.msra.mxu0 %v85
    %89 = vmatprep.subr.bf16.mxu0 0
    %90 = vmatpush1.bf16.msra.mxu0 0
    %91 = vmatprep.subr.bf16.mxu0 0
    %92 = vmatpush1.bf16.msra.mxu0 0
    %93 = vmatprep.subr.bf16.mxu0 0
    %94 = vmatpush1.bf16.msra.mxu0 0
    %95 = vmatprep.subr.bf16.mxu0 0
    %96 = vmatpush1.bf16.msra.mxu0 0
    %97 = vmatprep.subr.bf16.mxu0 0
    %98 = vmatpush1.bf16.msra.mxu0 0
    %99 = vmatprep.subr.bf16.mxu0 0
    %100 = vmatpush1.bf16.msra.mxu0 0
    %101 = vmatprep.subr.bf16.mxu0 0
    %102 = vmatpush1.bf16.msra.mxu0 0
    %103 = vmatprep.subr.bf16.mxu0 0
    %104 = vmatpush1.bf16.msra.mxu0 0
    %105 = vmatprep.subr.bf16.mxu0 0
    %106 = vmatpush1.bf16.msra.mxu0 0
    %107 = vmatprep.subr.bf16.mxu0 0
    %108 = vmatpush1.bf16.msra.mxu0 0
    %109 = vmatprep.subr.bf16.mxu0 0
    %110 = vmatpush1.bf16.msra.mxu0 0
    %111 = vmatprep.subr.bf16.mxu0 0
    %112 = vmatpush1.bf16.msra.mxu0 0
    %113 = vmatprep.subr.bf16.mxu0 0
    %114 = vmatpush1.bf16.msra.mxu0 0
    %115 = vmatprep.subr.bf16.mxu0 0
    %116 = vmatpush1.bf16.msra.mxu0 0
    %117 = vmatprep.subr.bf16.mxu0 0
    %118 = vmatpush1.bf16.msra.mxu0 0
    %119 = vmatprep.mubr.bf16.mxu0 0
    %120 = vmatmul.mubr.bf16.gmra.mrb[0].mxu0 %v75
    %v121 = vpop.f32.mrb[0].mxu0
    %v122 = vadd.f32 %v41, %v121
    %v123 = vpop.f32.mrb[0].mxu0
    %v124 = vpop.f32.mrb[0].mxu0
    %v125 = vadd.f32 %v46, %v124
    %v126 = vpop.f32.mrb[0].mxu0
    %127 = vmatprep.mubr.bf16.mxu0 0
    %128 = vmatmul.mubr.bf16.gmra.mrb[0].mxu0 %v78
    %v129 = vpop.f32.mrb[0].mxu0
    %v130 = vadd.f32 %v51, %v129
    %v131 = vpop.f32.mrb[0].mxu0
    %v132 = vpop.f32.mrb[0].mxu0
    %v133 = vadd.f32 %v56, %v132
    %v134 = vpop.f32.mrb[0].mxu0
    %135 = vdwg.mxu0
    %v136 = vmax.f32 %v122, 0.0
    %v137 = vmax.f32 %v125, 0.0
    %v138 = vmax.f32 %v130, 0.0
    %v139 = vmax.f32 %v133, 0.0
    %v140 = vpack.c.bf16 %v137, %v136
    %v141 = vpack.c.bf16 %v139, %v138
    %v142 = vld [vmem:[%s3] sm:$0xf]
    %v143 = vld [vmem:[%s3 + $0x4] sm:$0xf]
    %v144 = vld [vmem:[%s3 + $0x8] sm:$0xf]
    %v145 = vld [vmem:[%s3 + $0xc] sm:$0xf]
    %v146 = vld [vmem:[%s4] sm:$0xff]
    %v147 = vld [vmem:[%s4 + $0x8] sm:$0xff]
    %v148 = vld [vmem:[%s4 + $0x10] sm:$0xff]
    %v149 = vld [vmem:[%s4 + $0x18] sm:$0xff]
    %151 = vset.pattern.permute.xlu0 0
    %152 = vperm.xlu0 %151, %v146
    %v153 = vpop.permute.xlu0 %152
    %156 = vset.pattern.permute.xlu0 0
    %157 = vperm.xlu0 %156, %v147
    %v158 = vpop.permute.xlu0 %157
    %161 = vset.pattern.permute.xlu0 0
    %162 = vperm.xlu0 %161, %v148
    %v163 = vpop.permute.xlu0 %162
    %166 = vset.pattern.permute.xlu0 0
    %167 = vperm.xlu0 %166, %v149
    %v168 = vpop.permute.xlu0 %167
    %v174 = vunpack.c.l.b16 %v142
    %v175 = vunpack.c.l.b16 %v143
    %v176 = vunpack.c.l.b16 %v144
    %v177 = vunpack.c.l.b16 %v145
    %v178 = vpack.c.b16 %v175, %v174
    %v179 = vpack.c.b16 %v177, %v176
    %vm180 = vcmask 261120
    %v182 = vsel %vm180, %v178, 0
    %v185 = vsel %vm180, %v179, 0
    %187 = vmatprep.subr.bf16.mxu0 0
    %188 = vmatpush1.bf16.msra.mxu0 %v140
    %189 = vmatprep.subr.bf16.mxu0 0
    %190 = vmatpush1.bf16.msra.mxu0 %v141
    %191 = vmatprep.subr.bf16.mxu0 0
    %192 = vmatpush1.bf16.msra.mxu0 0
    %193 = vmatprep.subr.bf16.mxu0 0
    %194 = vmatpush1.bf16.msra.mxu0 0
    %195 = vmatprep.subr.bf16.mxu0 0
    %196 = vmatpush1.bf16.msra.mxu0 0
    %197 = vmatprep.subr.bf16.mxu0 0
    %198 = vmatpush1.bf16.msra.mxu0 0
    %199 = vmatprep.subr.bf16.mxu0 0
    %200 = vmatpush1.bf16.msra.mxu0 0
    %201 = vmatprep.subr.bf16.mxu0 0
    %202 = vmatpush1.bf16.msra.mxu0 0
    %203 = vmatprep.subr.bf16.mxu0 0
    %204 = vmatpush1.bf16.msra.mxu0 0
    %205 = vmatprep.subr.bf16.mxu0 0
    %206 = vmatpush1.bf16.msra.mxu0 0
    %207 = vmatprep.subr.bf16.mxu0 0
    %208 = vmatpush1.bf16.msra.mxu0 0
    %209 = vmatprep.subr.bf16.mxu0 0
    %210 = vmatpush1.bf16.msra.mxu0 0
    %211 = vmatprep.subr.bf16.mxu0 0
    %212 = vmatpush1.bf16.msra.mxu0 0
    %213 = vmatprep.subr.bf16.mxu0 0
    %214 = vmatpush1.bf16.msra.mxu0 0
    %215 = vmatprep.subr.bf16.mxu0 0
    %216 = vmatpush1.bf16.msra.mxu0 0
    %217 = vmatprep.subr.bf16.mxu0 0
    %218 = vmatpush1.bf16.msra.mxu0 0
    %219 = vmatprep.mubr.bf16.mxu0 0
    %220 = vmatmul.mubr.bf16.gmra.mrb[0].mxu0 %v182
    %v221 = vpop.f32.mrb[0].mxu0
    %v222 = vadd.f32 %v153, %v221
    %v223 = vpop.f32.mrb[0].mxu0
    %v224 = vpop.f32.mrb[0].mxu0
    %v225 = vadd.f32 %v158, %v224
    %v226 = vpop.f32.mrb[0].mxu0
    %227 = vmatprep.mubr.bf16.mxu0 0
    %228 = vmatmul.mubr.bf16.gmra.mrb[0].mxu0 %v185
    %v229 = vpop.f32.mrb[0].mxu0
    %v230 = vadd.f32 %v163, %v229
    %v231 = vpop.f32.mrb[0].mxu0
    %v232 = vpop.f32.mrb[0].mxu0
    %v233 = vadd.f32 %v168, %v232
    %v234 = vpop.f32.mrb[0].mxu0
    %235 = vdwg.mxu0
    %v236 = vmax.f32 %v222, 0.0
    %v237 = vmax.f32 %v225, 0.0
    %v238 = vmax.f32 %v230, 0.0
    %v239 = vmax.f32 %v233, 0.0
    %v240 = vpack.c.bf16 %v237, %v236
    %v241 = vpack.c.bf16 %v239, %v238
    %v242 = vld [vmem:[%s5] sm:$0x3]
    %v243 = vld [vmem:[%s6] sm:$0x7]
    %245 = vset.pattern.permute.xlu0 0
    %246 = vperm.xlu0 %245, %v243
    %v247 = vpop.permute.xlu0 %246
    %v250 = vsel %vm180, %v242, 0
    %252 = vmatprep.subr.bf16.mxu0 0
    %253 = vmatpush1.bf16.msra.mxu0 %v240
    %254 = vmatprep.subr.bf16.mxu0 0
    %255 = vmatpush1.bf16.msra.mxu0 %v241
    %256 = vmatprep.subr.bf16.mxu0 0
    %257 = vmatpush1.bf16.msra.mxu0 0
    %258 = vmatprep.subr.bf16.mxu0 0
    %259 = vmatpush1.bf16.msra.mxu0 0
    %260 = vmatprep.subr.bf16.mxu0 0
    %261 = vmatpush1.bf16.msra.mxu0 0
    %262 = vmatprep.subr.bf16.mxu0 0
    %263 = vmatpush1.bf16.msra.mxu0 0
    %264 = vmatprep.subr.bf16.mxu0 0
    %265 = vmatpush1.bf16.msra.mxu0 0
    %266 = vmatprep.subr.bf16.mxu0 0
    %267 = vmatpush1.bf16.msra.mxu0 0
    %268 = vmatprep.subr.bf16.mxu0 0
    %269 = vmatpush1.bf16.msra.mxu0 0
    %270 = vmatprep.subr.bf16.mxu0 0
    %271 = vmatpush1.bf16.msra.mxu0 0
    %272 = vmatprep.subr.bf16.mxu0 0
    %273 = vmatpush1.bf16.msra.mxu0 0
    %274 = vmatprep.subr.bf16.mxu0 0
    %275 = vmatpush1.bf16.msra.mxu0 0
    %276 = vmatprep.subr.bf16.mxu0 0
    %277 = vmatpush1.bf16.msra.mxu0 0
    %278 = vmatprep.subr.bf16.mxu0 0
    %279 = vmatpush1.bf16.msra.mxu0 0
    %280 = vmatprep.subr.bf16.mxu0 0
    %281 = vmatpush1.bf16.msra.mxu0 0
    %282 = vmatprep.subr.bf16.mxu0 0
    %283 = vmatpush1.bf16.msra.mxu0 0
    %284 = vmatprep.mubr.bf16.mxu0 0
    %285 = vmatmul.mubr.bf16.gmra.mrb[0].mxu0 %v250
    %v286 = vpop.f32.mrb[0].mxu0
    %v287 = vadd.f32 %v247, %v286
    %v288 = vpop.f32.mrb[0].mxu0
    %v289 = vpop.f32.mrb[0].mxu0
    %v290 = vpop.f32.mrb[0].mxu0
    %291 = vdwg.mxu0
    %292 = vst [vmem:[#allocation2] sm:$0x7] %v287
    // Predicated region
    $region30: #{tpu_custom_call.1} parent=1 // pred_check
      _
    $region31: #{tpu_custom_call.1} parent=1 // pred_check_branch
      %294 = sbr.rel (0) target = $region33
    $region32: #{tpu_custom_call.1} parent=1 // pred_region
      %s296 = ssub.s32 64, 64
      %297 = vsyncadd [#allocation3], %s296
      %s299 = sshll.u32 [#allocation2], 4
      %s300 = int_to_ptr.vmem [resolvable:$true] %s299
      %302 = dma.vmem_to_hbm [thread:$0]  %s300, 64, %s7, [#allocation3]
    $region33: #{tpu_custom_call.1} parent=1 // pred_fallthru
      _
    // Predicated region
    $region34: #{tpu_custom_call.1} parent=1 // pred_check
      _
    $region35: #{tpu_custom_call.1} parent=1 // pred_check_branch
      %304 = sbr.rel (0) target = $region37
    $region36: #{tpu_custom_call.1} parent=1 // pred_region
      %305 = dma.done [#allocation3], 64
    $region37: #{tpu_custom_call.1} parent=1 // pred_fallthru
      _
    %306 = vsyncpa [#allocation3], 1

</llo_original>
